<compile_context>
chip_gen: v5e
topology: v5e:2x2
jax: 0.10.0
libtpu: 0.0.40
codegen_flags: <defaults>
</compile_context>

<pallas_src>
import functools

import jax
import jax.numpy as jnp
from jax.experimental import pallas as pl
from jax.experimental.pallas import tpu as pltpu


def _round_up(n, m):
    return ((n + m - 1) // m) * m


def _policy_kernel(x_ref, w1_ref, b1_ref, w2_ref, b2_ref, out_ref):
    # fc1 (bf16 MXU operands, f32 accumulate) + bias + ReLU
    xb = x_ref[...].astype(jnp.bfloat16)
    h = jnp.dot(xb, w1_ref[...], preferred_element_type=jnp.float32) + b1_ref[...]
    h = jnp.maximum(h, 0.0)

    # fc2 (bf16 MXU operands, f32 accumulate) + bias.  Padded output lanes carry
    # bias -1e30 so they exp() to exactly 0 and the softmax over the real lanes
    # is unchanged.
    logits = (
        jnp.dot(h.astype(jnp.bfloat16), w2_ref[...], preferred_element_type=jnp.float32)
        + b2_ref[...]
    )

    # numerically stable softmax over the lane-padded axis; denominator is the
    # sum over real lanes only (padded lanes contribute exp(-1e30)==0).
    m = jnp.max(logits, axis=-1, keepdims=True)
    e = jnp.exp(logits - m)
    denom = jnp.sum(e, axis=-1, keepdims=True)

    # Store only the real output columns (out_ref is (TB, Out), Out < 128).
    # Masked vst cost hides under DMA in this mem-bound regime.
    out_w = out_ref.shape[-1]
    out_ref[...] = (e[:, :out_w] / denom).astype(out_ref.dtype)


def prepare_params(w1, b1, w2, b2):
    """One-time weight prep: pad hidden/output dims to 128 lanes, cast weights to bf16.

    w1: (In, H), b1: (1, H) or (H,), w2: (H, Out), b2: (1, Out) or (Out,)
    Returns (w1p, b1p, w2p, b2p) ready for policy_network_forward.
    Call this once at init / after each parameter update, NOT per forward.
    """
    In, H = w1.shape
    Out = w2.shape[1]
    H_pad = _round_up(H, 128)
    Out_pad = _round_up(Out, 128)

    w1p = jnp.zeros((In, H_pad), jnp.float32).at[:, :H].set(w1).astype(jnp.bfloat16)
    b1p = jnp.zeros((1, H_pad), jnp.float32).at[:, :H].set(jnp.reshape(b1, (1, H)))
    w2p = jnp.zeros((H_pad, Out_pad), jnp.float32).at[:H, :Out].set(w2).astype(jnp.bfloat16)
    # padded output lanes get a huge negative bias -> exp()==0 -> softmax unchanged
    b2p = jnp.full((1, Out_pad), -1e30, jnp.float32).at[:, :Out].set(jnp.reshape(b2, (1, Out)))
    return w1p, b1p, w2p, b2p


@functools.partial(jax.jit, static_argnames=("out_size", "tile_b"))
def policy_network_forward(x, w1p, b1p, w2p, b2p, *, out_size, tile_b=4096):
    """x: (B, In) f32 (or bf16), prepared params from prepare_params -> (B, out_size) f32."""
    B, In = x.shape
    H_pad = w1p.shape[1]
    Out_pad = w2p.shape[1]
    Out = int(out_size)

    # --- batch tiling ---
    TB = min(int(tile_b), _round_up(B, 8))
    # Guarantee >=2 batch tiles when possible so both v7x TensorCores get work.
    if (B + TB - 1) // TB == 1 and B >= 16:
        TB = min(TB, _round_up((B + 1) // 2, 8))

    if B % TB != 0:
        B_pad = _round_up(B, TB)
        xp = jnp.zeros((B_pad, In), x.dtype).at[:B, :].set(x)
    else:
        B_pad = B
        xp = x

    grid = (B_pad // TB,)

    # NOTE: weight/bias specs are grid-invariant (index_map -> (0,0)); a
    # pipeline_mode=pl.Buffered(1) hint would shave their second pipeline
    # buffer, but VMEM is not a constraint at these shapes so we keep defaults.
    out = pl.pallas_call(
        _policy_kernel,
        out_shape=jax.ShapeDtypeStruct((B_pad, Out), jnp.float32),
        grid=grid,
        in_specs=[
            pl.BlockSpec((TB, In), lambda i: (i, 0)),          # x: one batch tile per step
            pl.BlockSpec((In, H_pad), lambda i: (0, 0)),       # w1: VMEM-resident
            pl.BlockSpec((1, H_pad), lambda i: (0, 0)),        # b1: VMEM-resident
            pl.BlockSpec((H_pad, Out_pad), lambda i: (0, 0)),  # w2: VMEM-resident
            pl.BlockSpec((1, Out_pad), lambda i: (0, 0)),      # b2: VMEM-resident
        ],
        out_specs=pl.BlockSpec((TB, Out), lambda i: (i, 0)),   # only real Out lanes stored
        compiler_params=pltpu.CompilerParams(
            dimension_semantics=("parallel",),  # batch tiles independent -> both TCs on v7x
        ),
    )(xp, w1p, b1p, w2p, b2p)

    if B_pad != B:
        out = out[:B]
    return out


def init_params(key, input_size, hidden_size, output_size):
    """Deterministic init matching torch.nn.Linear default (uniform(-1/sqrt(fan_in), +))."""
    k1, k2, k3, k4 = jax.random.split(key, 4)
    bound1 = 1.0 / jnp.sqrt(float(input_size))
    bound2 = 1.0 / jnp.sqrt(float(hidden_size))
    # stored as (in, out); equivalent to torch weight (out, in) transposed
    w1 = jax.random.uniform(k1, (input_size, hidden_size), jnp.float32, -bound1, bound1)
    b1 = jax.random.uniform(k2, (1, hidden_size), jnp.float32, -bound1, bound1)
    w2 = jax.random.uniform(k3, (hidden_size, output_size), jnp.float32, -bound2, bound2)
    b2 = jax.random.uniform(k4, (1, output_size), jnp.float32, -bound2, bound2)
    return w1, b1, w2, b2


def reference_forward_bf16(x, w1, b1, w2, b2):
    """Mirrors the kernel's numerics: bf16 MXU operands, f32 accumulation/softmax."""
    h = jnp.maximum(
        jnp.dot(x.astype(jnp.bfloat16), w1.astype(jnp.bfloat16),
                preferred_element_type=jnp.float32) + b1, 0.0)
    logits = jnp.dot(h.astype(jnp.bfloat16), w2.astype(jnp.bfloat16),
                     preferred_element_type=jnp.float32) + b2
    return jax.nn.softmax(logits, axis=-1)


def reference_forward_f32(x, w1, b1, w2, b2):
    """Full-f32 forward (torch semantics) for a loose sanity check."""
    h = jnp.maximum(x @ w1 + b1, 0.0)
    logits = h @ w2 + b2
    return jax.nn.softmax(logits, axis=-1)


if __name__ == "__main__":
    input_size, hidden_size, output_size = 32, 64, 16
    batch = 8

    key = jax.random.PRNGKey(0)
    kx, kp = jax.random.split(key)
    x = jax.random.normal(kx, (batch, input_size), jnp.float32)
    w1, b1, w2, b2 = init_params(kp, input_size, hidden_size, output_size)

    # one-time weight prep (hoisted out of the forward)
    params = prepare_params(w1, b1, w2, b2)

    out = policy_network_forward(x, *params, out_size=output_size)
    out = jax.block_until_ready(out)

    ref_bf16 = reference_forward_bf16(x, w1, b1, w2, b2)
    ref_f32 = reference_forward_f32(x, w1, b1, w2, b2)

    assert out.shape == (batch, output_size)
    # tight check vs. a reference with the same bf16-MXU / f32-softmax numerics
    assert jnp.allclose(out, ref_bf16, atol=1e-3, rtol=1e-3)
    # loose check vs. the full-f32 torch-style forward (bf16 operand rounding only)
    assert jnp.allclose(out, ref_f32, atol=5e-2, rtol=5e-2)
    # probabilities sum to 1 (exact f32 softmax divide in-kernel)
    assert jnp.allclose(jnp.sum(out, axis=-1), 1.0, atol=1e-4)

    print("KERNEL_OK")
</pallas_src>

<mosaic_0001>
module attributes {stable_mosaic.version = 11 : i64} {
  func.func @_policy_kernel(%arg0: i32, %arg1: memref<8x32xf32, #tpu.memory_space<vmem>>, %arg2: memref<32x128xbf16, #tpu.memory_space<vmem>>, %arg3: memref<1x128xf32, #tpu.memory_space<vmem>>, %arg4: memref<128x128xbf16, #tpu.memory_space<vmem>>, %arg5: memref<1x128xf32, #tpu.memory_space<vmem>>, %arg6: memref<8x16xf32, #tpu.memory_space<vmem>>) attributes {dimension_semantics = [#tpu.dimension_semantics<parallel>], iteration_bounds = array<i64: 1>, scalar_prefetch = 0 : i64, scratch_operands = 0 : i64, tpu.core_type = #tpu.core_type<tc>, window_params = [{transform_indices = @transform_0, window_bounds = array<i64: 8, 32>}, {pipeline_mode = #tpu.pipeline_mode<synchronous>, transform_indices = @transform_1, window_bounds = array<i64: 32, 128>}, {pipeline_mode = #tpu.pipeline_mode<synchronous>, transform_indices = @transform_2, window_bounds = array<i64: 1, 128>}, {pipeline_mode = #tpu.pipeline_mode<synchronous>, transform_indices = @transform_3, window_bounds = array<i64: 128, 128>}, {pipeline_mode = #tpu.pipeline_mode<synchronous>, transform_indices = @transform_4, window_bounds = array<i64: 1, 128>}, {transform_indices = @transform_5, window_bounds = array<i64: 8, 16>}]} {
    %c0 = arith.constant 0 : index
    %c0_0 = arith.constant 0 : index
    %0 = vector.load %arg1[%c0, %c0_0] : memref<8x32xf32, #tpu.memory_space<vmem>>, vector<8x32xf32>
    %1 = arith.truncf %0 : vector<8x32xf32> to vector<8x32xbf16>
    %c0_1 = arith.constant 0 : index
    %c0_2 = arith.constant 0 : index
    %2 = vector.load %arg2[%c0_1, %c0_2] : memref<32x128xbf16, #tpu.memory_space<vmem>>, vector<32x128xbf16>
    %cst = arith.constant dense<0.000000e+00> : vector<8x128xf32>
    %3 = tpu.matmul %1, %2, %cst {dimension_numbers = #tpu.dot_dimension_numbers<[1], [0], [0], [1], [0, 0, 1, 1], [], []>} : vector<8x32xbf16>, vector<32x128xbf16>, vector<8x128xf32> -> vector<8x128xf32>
    %c0_3 = arith.constant 0 : index
    %c0_4 = arith.constant 0 : index
    %4 = vector.load %arg3[%c0_3, %c0_4] : memref<1x128xf32, #tpu.memory_space<vmem>>, vector<1x128xf32>
    %5 = vector.broadcast %4 : vector<1x128xf32> to vector<8x128xf32>
    %6 = arith.addf %3, %5 : vector<8x128xf32>
    %cst_5 = arith.constant 0.000000e+00 : f32
    %7 = vector.broadcast %cst_5 : f32 to vector<8x128xf32>
    %8 = arith.maximumf %6, %7 : vector<8x128xf32>
    %9 = arith.truncf %8 : vector<8x128xf32> to vector<8x128xbf16>
    %c0_6 = arith.constant 0 : index
    %c0_7 = arith.constant 0 : index
    %10 = vector.load %arg4[%c0_6, %c0_7] : memref<128x128xbf16, #tpu.memory_space<vmem>>, vector<128x128xbf16>
    %cst_8 = arith.constant dense<0.000000e+00> : vector<8x128xf32>
    %11 = tpu.matmul %9, %10, %cst_8 {dimension_numbers = #tpu.dot_dimension_numbers<[1], [0], [0], [1], [0, 0, 1, 1], [], []>} : vector<8x128xbf16>, vector<128x128xbf16>, vector<8x128xf32> -> vector<8x128xf32>
    %c0_9 = arith.constant 0 : index
    %c0_10 = arith.constant 0 : index
    %12 = vector.load %arg5[%c0_9, %c0_10] : memref<1x128xf32, #tpu.memory_space<vmem>>, vector<1x128xf32>
    %13 = vector.broadcast %12 : vector<1x128xf32> to vector<8x128xf32>
    %14 = arith.addf %11, %13 : vector<8x128xf32>
    %cst_11 = arith.constant dense<0xFF800000> : vector<8xf32>
    %15 = vector.multi_reduction <maximumf>, %14, %cst_11 [1] : vector<8x128xf32> to vector<8xf32>
    %16 = vector.shape_cast %15 : vector<8xf32> to vector<8x1xf32>
    %17 = vector.broadcast %16 : vector<8x1xf32> to vector<8x128xf32>
    %18 = arith.subf %14, %17 : vector<8x128xf32>
    %19 = math.exp %18 : vector<8x128xf32>
    %cst_12 = arith.constant dense<0.000000e+00> : vector<8xf32>
    %20 = vector.multi_reduction <add>, %19, %cst_12 [1] : vector<8x128xf32> to vector<8xf32>
    %21 = vector.shape_cast %20 : vector<8xf32> to vector<8x1xf32>
    %22 = vector.extract_strided_slice %19 {offsets = [0, 0], sizes = [8, 16], strides = [1, 1]} : vector<8x128xf32> to vector<8x16xf32>
    %23 = vector.broadcast %21 : vector<8x1xf32> to vector<8x16xf32>
    %24 = arith.divf %22, %23 : vector<8x16xf32>
    %c0_13 = arith.constant 0 : index
    %c0_14 = arith.constant 0 : index
    %25 = vector.load %arg6[%c0_13, %c0_14] : memref<8x16xf32, #tpu.memory_space<vmem>>, vector<8x16xf32>
    tpu.vector_store %arg6[%c0_13, %c0_14], %24 {strides = array<i32>} : memref<8x16xf32, #tpu.memory_space<vmem>>, vector<8x16xf32>,
    return
  }
  func.func @transform_0(%arg0: i32) -> (i32, i32) {
    %c0_i32 = arith.constant 0 : i32
    %c0_i32_0 = arith.constant 0 : i32
    return %arg0, %c0_i32 : i32, i32
  }
  func.func @transform_1(%arg0: i32) -> (i32, i32) {
    %c0_i32 = arith.constant 0 : i32
    %c0_i32_0 = arith.constant 0 : i32
    %c0_i32_1 = arith.constant 0 : i32
    return %c0_i32, %c0_i32_0 : i32, i32
  }
  func.func @transform_2(%arg0: i32) -> (i32, i32) {
    %c0_i32 = arith.constant 0 : i32
    %c0_i32_0 = arith.constant 0 : i32
    %c0_i32_1 = arith.constant 0 : i32
    return %c0_i32, %c0_i32_0 : i32, i32
  }
  func.func @transform_3(%arg0: i32) -> (i32, i32) {
    %c0_i32 = arith.constant 0 : i32
    %c0_i32_0 = arith.constant 0 : i32
    %c0_i32_1 = arith.constant 0 : i32
    return %c0_i32, %c0_i32_0 : i32, i32
  }
  func.func @transform_4(%arg0: i32) -> (i32, i32) {
    %c0_i32 = arith.constant 0 : i32
    %c0_i32_0 = arith.constant 0 : i32
    %c0_i32_1 = arith.constant 0 : i32
    return %c0_i32, %c0_i32_0 : i32, i32
  }
  func.func @transform_5(%arg0: i32) -> (i32, i32) {
    %c0_i32 = arith.constant 0 : i32
    %c0_i32_0 = arith.constant 0 : i32
    return %arg0, %c0_i32 : i32, i32
  }
}

</mosaic_0001>

<llo_original>
// kernel: policy_network_forward.1
$region0: #{policy_network_forward.1}
  #allocation0 [shape = 'u32[]', space=smem, size = 0x4, offset = 0x4, fixed_abs, tag = 'smem constant byte address 0x4 - core index']
  #allocation1 [shape = 'u32[72,128]{1,0:T(1,128)}', space=vmem, size = 0x9000, scoped, tag = 'internal scratch']
  %s0 = inlined_call_operand.hbm [shape: f32[8,32], index: 0, kind: input, shape index: {}]
  %s1 = inlined_call_operand.hbm [shape: bf16[32,128], index: 1, kind: input, shape index: {}]
  %s2 = inlined_call_operand.vmem [shape: f32[1,128], index: 2, kind: input, shape index: {}]
  %s3 = inlined_call_operand.hbm [shape: bf16[128,128], index: 3, kind: input, shape index: {}]
  %s4 = inlined_call_operand.vmem [shape: f32[1,128], index: 4, kind: input, shape index: {}]
  %s5 = inlined_call_operand.hbm [shape: f32[8,16], index: 5, kind: output, shape index: {}]
  %s6 = sld [smem:[#allocation0]]
  $region42: #{policy_network_forward.1} parent=0
    _
  %s8 = ssub.s32 1, %s6
  %s9 = scalar_select 0, %s8, %s6
  $region1: #{policy_network_forward.1} parent=0
    #allocation2 [shape = 'u8[4096]{0}', space=vmem, size = 0x1000, scoped, tag = 'input window, operand 0, single buffered']
    #allocation3 [shape = 's32[1]{0}', space=sflag, size = 0x4, scoped, tag = 'scoped memory for policy_network_forward.1']
    #allocation4 [shape = 's32[1]{0}', space=sflag, size = 0x4, scoped, tag = 'scoped memory for policy_network_forward.1']
    #allocation5 [shape = 'u8[8192]{0}', space=vmem, size = 0x2000, scoped, tag = 'input window, operand 1, single buffered']
    #allocation6 [shape = 's32[1]{0}', space=sflag, size = 0x4, scoped, tag = 'scoped memory for policy_network_forward.1']
    #allocation7 [shape = 'u8[32768]{0}', space=vmem, size = 0x8000, scoped, tag = 'input window, operand 3, single buffered']
    #allocation8 [shape = 'u8[4096]{0}', space=vmem, size = 0x1000, scoped, tag = 'output window, operand 0, single buffered']
    %10 = vsyncpa [#allocation3], 0
    %11 = vsyncpa [#allocation6], 0
    %12 = vsyncpa [#allocation4], 0
    // Predicated region
    $region2: #{policy_network_forward.1} parent=1 // pred_check
      _
    $region3: #{policy_network_forward.1} parent=1 // pred_check_branch
      %14 = sbr.rel (0) target = $region5
    $region4: #{policy_network_forward.1} parent=1 // pred_region
      %16 = vsyncadd [#allocation3], 0
      %s18 = sshll.u32 %s0, 4
      %s19 = int_to_ptr.hbm [resolvable:$true] %s18
      %s20 = sshll.u32 [#allocation2], 4
      %s21 = int_to_ptr.vmem [resolvable:$true] %s20
      %23 = dma.hbm_to_vmem [thread:$0]  %s19, 128, %s21, [#allocation3]
    $region5: #{policy_network_forward.1} parent=1 // pred_fallthru
      _
    // Predicated region
    $region6: #{policy_network_forward.1} parent=1 // pred_check
      _
    $region7: #{policy_network_forward.1} parent=1 // pred_check_branch
      %25 = sbr.rel (0) target = $region9
    $region8: #{policy_network_forward.1} parent=1 // pred_region
      %27 = vsyncadd [#allocation6], 0
      %s28 = sshll.u32 %s1, 4
      %s29 = int_to_ptr.hbm [resolvable:$true] %s28
      %s30 = sshll.u32 [#allocation5], 4
      %s31 = int_to_ptr.vmem [resolvable:$true] %s30
      %36 = dma.hbm_to_vmem [thread:$0]  %s29, 256, %s31, [#allocation6], 64, 64, 4
    $region9: #{policy_network_forward.1} parent=1 // pred_fallthru
      _
    // Predicated region
    $region10: #{policy_network_forward.1} parent=1 // pred_check
      _
    $region11: #{policy_network_forward.1} parent=1 // pred_check_branch
      %38 = sbr.rel (0) target = $region13
    $region12: #{policy_network_forward.1} parent=1 // pred_region
      _
    $region13: #{policy_network_forward.1} parent=1 // pred_fallthru
      _
    // Predicated region
    $region14: #{policy_network_forward.1} parent=1 // pred_check
      _
    $region15: #{policy_network_forward.1} parent=1 // pred_check_branch
      %40 = sbr.rel (0) target = $region17
    $region16: #{policy_network_forward.1} parent=1 // pred_region
      %42 = vsyncadd [#allocation6], 0
      %s43 = sshll.u32 %s3, 4
      %s44 = int_to_ptr.hbm [resolvable:$true] %s43
      %s45 = sshll.u32 [#allocation7], 4
      %s46 = int_to_ptr.vmem [resolvable:$true] %s45
      %51 = dma.hbm_to_vmem [thread:$0]  %s44, 1024, %s46, [#allocation6], 64, 64, 4
    $region17: #{policy_network_forward.1} parent=1 // pred_fallthru
      _
    // Predicated region
    $region18: #{policy_network_forward.1} parent=1 // pred_check
      _
    $region19: #{policy_network_forward.1} parent=1 // pred_check_branch
      %53 = sbr.rel (0) target = $region21
    $region20: #{policy_network_forward.1} parent=1 // pred_region
      _
    $region21: #{policy_network_forward.1} parent=1 // pred_fallthru
      _
    // Predicated region
    $region22: #{policy_network_forward.1} parent=1 // pred_check
      _
    $region23: #{policy_network_forward.1} parent=1 // pred_check_branch
      %55 = sbr.rel (0) target = $region25
    $region24: #{policy_network_forward.1} parent=1 // pred_region
      %57 = dma.done [#allocation3], 128
    $region25: #{policy_network_forward.1} parent=1 // pred_fallthru
      _
    // Predicated region
    $region26: #{policy_network_forward.1} parent=1 // pred_check
      _
    $region27: #{policy_network_forward.1} parent=1 // pred_check_branch
      %59 = sbr.rel (0) target = $region29
    $region28: #{policy_network_forward.1} parent=1 // pred_region
      %61 = dma.done [#allocation6], 256
    $region29: #{policy_network_forward.1} parent=1 // pred_fallthru
      _
    // Predicated region
    $region30: #{policy_network_forward.1} parent=1 // pred_check
      _
    $region31: #{policy_network_forward.1} parent=1 // pred_check_branch
      %63 = sbr.rel (0) target = $region33
    $region32: #{policy_network_forward.1} parent=1 // pred_region
      %65 = dma.done [#allocation6], 1024
    $region33: #{policy_network_forward.1} parent=1 // pred_fallthru
      _
    %v67 = vld [vmem:[#allocation2] sm:$0xff]
    %v68 = vpack.c.bf16 %v67, %v67
    %v69 = vld [vmem:[#allocation5] sm:$0xf]
    %v70 = vld [vmem:[#allocation5 + $0x4] sm:$0xf]
    %v71 = vld [vmem:[#allocation5 + $0x8] sm:$0xf]
    %v72 = vld [vmem:[#allocation5 + $0xc] sm:$0xf]
    %v73 = vld [vmem:[%s2] sm:$0x1]
    %v75 = vperm.slane %v73, 0
    %v81 = vunpack.c.l.b16 %v69
    %v82 = vunpack.c.l.b16 %v70
    %v83 = vunpack.c.l.b16 %v71
    %v84 = vunpack.c.l.b16 %v72
    %v85 = vpack.c.b16 %v82, %v81
    %v86 = vpack.c.b16 %v84, %v83
    %vm89 = vcmask 261120
    %v91 = vsel %vm89, %v68, 0
    %93 = vmatpush.bf16.msra.mxu0 0
    %94 = vmatpush.bf16.msra.mxu0 0
    %95 = vmatpush.bf16.msra.mxu0 0
    %96 = vmatpush.bf16.msra.mxu0 0
    %97 = vmatpush.bf16.msra.mxu0 0
    %98 = vmatpush.bf16.msra.mxu0 0
    %99 = vmatpush.bf16.msra.mxu0 %v86
    %100 = vmatpush.bf16.msra.mxu0 %v85
    %101 = vmatmul.bf16.gmra.mxu0 %v91
    %v102 = vpop.f32.mrf.mxu0
    %v103 = vadd.f32 %v75, %v102
    %v104 = vpop.f32.mrf.mxu0
    %105 = vdwg.mxu0
    %v106 = vmax.f32 %v103, 0.0
    %v107 = vpack.c.bf16 %v106, %v106
    %v108 = vld [vmem:[#allocation7] sm:$0xf]
    %v109 = vld [vmem:[#allocation7 + $0x4] sm:$0xf]
    %v110 = vld [vmem:[#allocation7 + $0x8] sm:$0xf]
    %v111 = vld [vmem:[#allocation7 + $0xc] sm:$0xf]
    %v112 = vld [vmem:[#allocation7 + $0x10] sm:$0xf]
    %v113 = vld [vmem:[#allocation7 + $0x14] sm:$0xf]
    %v114 = vld [vmem:[#allocation7 + $0x18] sm:$0xf]
    %v115 = vld [vmem:[#allocation7 + $0x1c] sm:$0xf]
    %v116 = vld [vmem:[#allocation7 + $0x20] sm:$0xf]
    %v117 = vld [vmem:[#allocation7 + $0x24] sm:$0xf]
    %v118 = vld [vmem:[#allocation7 + $0x28] sm:$0xf]
    %v119 = vld [vmem:[#allocation7 + $0x2c] sm:$0xf]
    %v120 = vld [vmem:[#allocation7 + $0x30] sm:$0xf]
    %v121 = vld [vmem:[#allocation7 + $0x34] sm:$0xf]
    %v122 = vld [vmem:[#allocation7 + $0x38] sm:$0xf]
    %v123 = vld [vmem:[#allocation7 + $0x3c] sm:$0xf]
    %v124 = vld [vmem:[%s4] sm:$0x1]
    %v126 = vperm.slane %v124, 0
    %v144 = vunpack.c.l.b16 %v108
    %v145 = vunpack.c.l.b16 %v109
    %v146 = vunpack.c.l.b16 %v110
    %v147 = vunpack.c.l.b16 %v111
    %v148 = vunpack.c.l.b16 %v112
    %v149 = vunpack.c.l.b16 %v113
    %v150 = vunpack.c.l.b16 %v114
    %v151 = vunpack.c.l.b16 %v115
    %v152 = vunpack.c.l.b16 %v116
    %v153 = vunpack.c.l.b16 %v117
    %v154 = vunpack.c.l.b16 %v118
    %v155 = vunpack.c.l.b16 %v119
    %v156 = vunpack.c.l.b16 %v120
    %v157 = vunpack.c.l.b16 %v121
    %v158 = vunpack.c.l.b16 %v122
    %v159 = vunpack.c.l.b16 %v123
    %v160 = vpack.c.b16 %v145, %v144
    %v161 = vpack.c.b16 %v147, %v146
    %v162 = vpack.c.b16 %v149, %v148
    %v163 = vpack.c.b16 %v151, %v150
    %v164 = vpack.c.b16 %v153, %v152
    %v165 = vpack.c.b16 %v155, %v154
    %v166 = vpack.c.b16 %v157, %v156
    %v167 = vpack.c.b16 %v159, %v158
    %176 = vmatpush.bf16.msra.mxu0 %v167
    %177 = vmatpush.bf16.msra.mxu0 %v166
    %178 = vmatpush.bf16.msra.mxu0 %v165
    %179 = vmatpush.bf16.msra.mxu0 %v164
    %180 = vmatpush.bf16.msra.mxu0 %v163
    %181 = vmatpush.bf16.msra.mxu0 %v162
    %182 = vmatpush.bf16.msra.mxu0 %v161
    %183 = vmatpush.bf16.msra.mxu0 %v160
    %184 = vmatmul.bf16.gmra.mxu0 %v107
    %v185 = vpop.f32.mrf.mxu0
    %v186 = vadd.f32 %v126, %v185
    %v187 = vpop.f32.mrf.mxu0
    %188 = vdwg.mxu0
    %189 = vmax.xlane.f32.xlu0 %v186
    %v190 = vpop.xlane.xlu0 %189
    %v191 = vsub.f32 %v186, %v190
    %v192 = vmul.f32 %v191, 1.442695
    %v193 = vpow.pop %v192
    %194 = vadd.xlane.f32.xlu0 %v193
    %v195 = vpop.xlane.xlu0 %194
    %v196 = vrcp.pop %v195
    %v197 = vmul.f32 %v195, %v196
    %v198 = vsub.f32 1.0, %v197
    %v199 = vmul.f32 %v196, %v198
    %v200 = vadd.f32 %v196, %v199
    %vm201 = vweird.f32 %v195
    %vm202 = vweird.f32 %v196
    %vm203 = vmor %vm201, %vm202
    %v204 = vsel %vm203, %v196, %v200
    %v205 = vand.u32 2147483647, %v195
    %vm206 = vcmp.eq.f32.partialorder %v205, 8.507059e+37
    %v207 = vand.u32 %v195, 2147483648
    %v208 = vor.u32 1.1754944e-38, %v207
    %v209 = vsel %vm206, %v208, %v204
    %v210 = vmul.f32 %v193, %v209
    %vm211 = vcmask 130048
    %212 = vst.msk [vmem:[#allocation8] sm:$0xff] %vm211, %v210
    // Predicated region
    $region34: #{policy_network_forward.1} parent=1 // pred_check
      _
    $region35: #{policy_network_forward.1} parent=1 // pred_check_branch
      %214 = sbr.rel (0) target = $region37
    $region36: #{policy_network_forward.1} parent=1 // pred_region
      %216 = vsyncadd [#allocation4], 0
      %s218 = sshll.u32 [#allocation8], 4
      %s219 = int_to_ptr.vmem [resolvable:$true] %s218
      %s220 = sshll.u32 %s5, 4
      %s221 = int_to_ptr.hbm [resolvable:$true] %s220
      %223 = dma.vmem_to_hbm [thread:$0]  %s219, 128, %s221, [#allocation4]
    $region37: #{policy_network_forward.1} parent=1 // pred_fallthru
      _
    // Predicated region
    $region38: #{policy_network_forward.1} parent=1 // pred_check
      _
    $region39: #{policy_network_forward.1} parent=1 // pred_check_branch
      %225 = sbr.rel (0) target = $region41
    $region40: #{policy_network_forward.1} parent=1 // pred_region
      %227 = dma.done [#allocation4], 128
    $region41: #{policy_network_forward.1} parent=1 // pred_fallthru
      _
    %228 = vsyncpa [#allocation3], 1
    %229 = vsyncpa [#allocation6], 1
    %230 = vsyncpa [#allocation4], 1

</llo_original>
